<compile_context>
chip_gen: v5e
topology: v5e:2x2
jax: 0.10.0
libtpu: 0.0.40
codegen_flags: <defaults>
</compile_context>

<pallas_src>
import functools
import math

import jax
import jax.numpy as jnp
from jax import lax
from jax.experimental import pallas as pl
from jax.experimental.pallas import tpu as pltpu


# ---------------------------------------------------------------------------
# Kernels
# ---------------------------------------------------------------------------
def _attn_single_pass_kernel(q_ref, k_ref, v_ref, o_ref, *, scale2):
    """One (batch, head-block) tile, whole KV row in one shot (no scratch).

    Block shapes:
      q_ref, k_ref, v_ref, o_ref : (1, Bh, C, T)
    """
    q = q_ref[0]          # [Bh, C, T]   input dtype, fed straight to the MXU
    k = k_ref[0]          # [Bh, C, T]
    v = v_ref[0]          # [Bh, C, T]

    # Transposed logits: w[b, s, t] = sum_c k[b, c, s] * q[b, c, t]
    # (t stays on the lane axis so the softmax stats broadcast over C).
    w = lax.dot_general(
        k, q,
        dimension_numbers=(((1,), (1,)), ((0,), (0,))),
        preferred_element_type=jnp.float32,
    ) * scale2                                                # [Bh, T, T] f32

    m = jnp.max(w, axis=1, keepdims=True)                     # [Bh, 1, T]
    p = jnp.exp(w - m)                                        # [Bh, T, T] f32
    inv_l = pl.reciprocal(jnp.sum(p, axis=1, keepdims=True), approx=True)
    # Normalize in f32, then cast to the input dtype for the PV matmul --
    # mirrors the reference's softmax(float).type(dtype).
    p = (p * inv_l).astype(v.dtype)

    # o[b, c, t] = sum_s v[b, c, s] * p[b, s, t]
    o = lax.dot_general(
        v, p,
        dimension_numbers=(((2,), (1,)), ((0,), (0,))),
        preferred_element_type=jnp.float32,
    )                                                         # [Bh, C, T] f32
    o_ref[0] = o.astype(o_ref.dtype)


def _attn_flash_kernel(q_ref, k_ref, v_ref, o_ref, m_sc, l_sc, acc_sc, *, scale2):
    """One (batch, head-block) tile, one KV tile (online softmax).

    Block shapes:
      q_ref, o_ref : (1, Bh, C, T)
      k_ref, v_ref : (1, Bh, C, Tkv)
    Scratch (f32, resident across the KV grid axis):
      m_sc, l_sc   : (Bh, 1, T)   running max / running normalizer
      acc_sc       : (Bh, C, T)   unnormalized output accumulator
    """
    kv = pl.program_id(2)

    @pl.when(kv == 0)
    def _init():
        m_sc[...] = jnp.full(m_sc.shape, -jnp.inf, dtype=jnp.float32)
        l_sc[...] = jnp.zeros(l_sc.shape, dtype=jnp.float32)
        acc_sc[...] = jnp.zeros(acc_sc.shape, dtype=jnp.float32)

    q = q_ref[0]          # [Bh, C, T]
    k = k_ref[0]          # [Bh, C, Tkv]
    v = v_ref[0]          # [Bh, C, Tkv]

    # Transposed logits: w[b, s, t] = sum_c k[b, c, s] * q[b, c, t]
    w = lax.dot_general(
        k, q,
        dimension_numbers=(((1,), (1,)), ((0,), (0,))),
        preferred_element_type=jnp.float32,
    ) * scale2                                                # [Bh, Tkv, T] f32

    m_prev = m_sc[...]                                        # [Bh, 1, T]
    m_new = jnp.maximum(m_prev, jnp.max(w, axis=1, keepdims=True))
    alpha = jnp.exp(m_prev - m_new)                           # [Bh, 1, T]
    p = jnp.exp(w - m_new)                                    # [Bh, Tkv, T] f32
    l_sc[...] = alpha * l_sc[...] + jnp.sum(p, axis=1, keepdims=True)

    # acc[b, c, t] += sum_s v[b, c, s] * p[b, s, t]  (probabilities cast back
    # to the input dtype before the PV matmul; accumulation stays f32).
    pv = lax.dot_general(
        v, p.astype(v.dtype),
        dimension_numbers=(((2,), (1,)), ((0,), (0,))),
        preferred_element_type=jnp.float32,
    )                                                         # [Bh, C, T] f32
    acc_sc[...] = alpha * acc_sc[...] + pv
    m_sc[...] = m_new

    @pl.when(kv == pl.num_programs(2) - 1)
    def _finalize():
        inv_l = pl.reciprocal(l_sc[...], approx=True)         # EUP slot, ~free
        o_ref[0] = (acc_sc[...] * inv_l).astype(o_ref.dtype)


# ---------------------------------------------------------------------------
# Tiling heuristics
# ---------------------------------------------------------------------------
_VMEM_BUDGET = 18 * 1024 * 1024   # per-grid-step working-set budget (fits v5e/v6e/v7x)


def _choose_tiles(n_heads, ch, length, itemsize, kv_block, head_block):
    # KV tile: whole row when it comfortably fits, otherwise the largest
    # 128-multiple that divides T (flash-style online softmax over KV tiles).
    if kv_block is not None:
        tkv = kv_block
    elif length <= 1024:
        tkv = length
    else:
        tkv = length
        for cand in (1024, 512, 256, 128):
            if length % cand == 0:
                tkv = cand
                break
    assert length % tkv == 0 and (tkv == length or tkv % 128 == 0), (length, tkv)
    single_pass = (tkv == length)

    if head_block is not None:
        bh = head_block
    else:
        def footprint(b):
            # double-buffered q/k/v/o tiles
            io = 2 * b * ch * (2 * length + 2 * tkv) * itemsize
            # f32 logits + probs intermediates
            interm = 2 * b * tkv * length * 4
            if single_pass:
                # f32 matmul result before the output cast
                return io + interm + b * ch * length * 4
            # f32 accumulator + m/l scratch (resident across the KV axis)
            scratch = b * (ch * length + 2 * 8 * length) * 4
            return io + interm + scratch

        bh = 1
        for cand in range(1, n_heads + 1):
            if n_heads % cand == 0 and footprint(cand) <= _VMEM_BUDGET:
                bh = cand
    assert n_heads % bh == 0, (n_heads, bh)
    return bh, tkv, single_pass


# ---------------------------------------------------------------------------
# Wrapper
# ---------------------------------------------------------------------------
def qkv_attention(qkv, n_heads, *, kv_block=None, head_block=None):
    """
    :param qkv: [N, 3*H*C, T] array of Qs, Ks, Vs (channel order: all-Q, all-K, all-V).
    :return:    [N, H*C, T] array after attention.
    """
    bs, width, length = qkv.shape
    assert width % (3 * n_heads) == 0
    ch = width // (3 * n_heads)
    scale = 1.0 / math.sqrt(math.sqrt(ch))
    scale2 = scale * scale  # folded into the f32 logits once, after the QK matmul

    itemsize = jnp.dtype(qkv.dtype).itemsize
    bh, tkv, single_pass = _choose_tiles(
        n_heads, ch, length, itemsize, kv_block, head_block)

    # Free, copy-less view: [N, 3*H*C, T] -> [N, 3*H, C, T].  Q/K/V sections are
    # addressed purely through the index_maps below -- no jnp.split copies.
    x = qkv.reshape(bs, 3 * n_heads, ch, length)

    hb_k = n_heads // bh            # first K head-block index
    hb_v = 2 * (n_heads // bh)      # first V head-block index

    cost = pl.CostEstimate(
        flops=4 * bs * n_heads * ch * length * length,        # QK^T + PV matmuls
        transcendentals=bs * n_heads * length * length,       # softmax exp
        bytes_accessed=4 * bs * n_heads * ch * length * itemsize,
    )

    if single_pass:
        # ---- fast path: whole KV row per step, no scratch ----
        grid = (bs, n_heads // bh)
        q_spec = pl.BlockSpec((1, bh, ch, length), lambda n, h: (n, h, 0, 0))
        k_spec = pl.BlockSpec((1, bh, ch, length), lambda n, h: (n, hb_k + h, 0, 0))
        v_spec = pl.BlockSpec((1, bh, ch, length), lambda n, h: (n, hb_v + h, 0, 0))
        o_spec = pl.BlockSpec((1, bh, ch, length), lambda n, h: (n, h, 0, 0))

        out = pl.pallas_call(
            functools.partial(_attn_single_pass_kernel, scale2=scale2),
            out_shape=jax.ShapeDtypeStruct((bs, n_heads, ch, length), qkv.dtype),
            grid_spec=pltpu.PrefetchScalarGridSpec(
                num_scalar_prefetch=0,
                grid=grid,
                in_specs=[q_spec, k_spec, v_spec],
                out_specs=o_spec,
            ),
            compiler_params=pltpu.CompilerParams(
                dimension_semantics=("parallel", "parallel"),
                vmem_limit_bytes=32 * 1024 * 1024,
            ),
            cost_estimate=cost,
        )(x, x, x)
    else:
        # ---- flash path: online softmax over KV tiles ----
        grid = (bs, n_heads // bh, length // tkv)
        q_spec = pl.BlockSpec((1, bh, ch, length), lambda n, h, kv: (n, h, 0, 0))
        k_spec = pl.BlockSpec((1, bh, ch, tkv),    lambda n, h, kv: (n, hb_k + h, 0, kv))
        v_spec = pl.BlockSpec((1, bh, ch, tkv),    lambda n, h, kv: (n, hb_v + h, 0, kv))
        o_spec = pl.BlockSpec((1, bh, ch, length), lambda n, h, kv: (n, h, 0, 0))

        out = pl.pallas_call(
            functools.partial(_attn_flash_kernel, scale2=scale2),
            out_shape=jax.ShapeDtypeStruct((bs, n_heads, ch, length), qkv.dtype),
            grid_spec=pltpu.PrefetchScalarGridSpec(
                num_scalar_prefetch=0,
                grid=grid,
                in_specs=[q_spec, k_spec, v_spec],
                out_specs=o_spec,
                scratch_shapes=[
                    pltpu.VMEM((bh, 1, length), jnp.float32),     # running max
                    pltpu.VMEM((bh, 1, length), jnp.float32),     # running normalizer
                    pltpu.VMEM((bh, ch, length), jnp.float32),    # output accumulator
                ],
            ),
            compiler_params=pltpu.CompilerParams(
                dimension_semantics=("parallel", "parallel", "arbitrary"),
                vmem_limit_bytes=32 * 1024 * 1024,
            ),
            cost_estimate=cost,
        )(x, x, x)

    return out.reshape(bs, n_heads * ch, length)


# ---------------------------------------------------------------------------
# Reference + tests
# ---------------------------------------------------------------------------
def qkv_attention_reference(qkv, n_heads):
    """Pure-JAX reference mirroring the PyTorch forward exactly."""
    bs, width, length = qkv.shape
    ch = width // (3 * n_heads)
    q, k, v = jnp.split(qkv, 3, axis=1)
    scale = 1.0 / math.sqrt(math.sqrt(ch))
    q = (q * scale).reshape(bs * n_heads, ch, length)
    k = (k * scale).reshape(bs * n_heads, ch, length)
    v = v.reshape(bs * n_heads, ch, length)
    w = jnp.einsum('bct,bcs->bts', q, k)
    w = jax.nn.softmax(w.astype(jnp.float32), axis=-1).astype(w.dtype)
    a = jnp.einsum('bts,bcs->bct', w, v)
    return a.reshape(bs, -1, length)


if __name__ == "__main__":
    key = jax.random.PRNGKey(0)
    k1, k2 = jax.random.split(key)

    # Test 1: small shapes -- single-pass path, all heads batched into one grid step.
    n_heads = 2
    N, C, T = 2, 16, 32
    qkv1 = jax.random.normal(k1, (N, 3 * n_heads * C, T), dtype=jnp.float32)
    out1 = jax.block_until_ready(qkv_attention(qkv1, n_heads))
    ref1 = qkv_attention_reference(qkv1, n_heads)
    assert out1.shape == (N, n_heads * C, T)
    assert jnp.allclose(out1, ref1, atol=2e-3, rtol=2e-3), "mismatch vs reference (test 1)"

    # Test 2: forces the KV-tiled online-softmax (flash) path (two KV steps of 128).
    n_heads2, N2, C2, T2 = 4, 1, 32, 256
    qkv2 = jax.random.normal(k2, (N2, 3 * n_heads2 * C2, T2), dtype=jnp.float32)
    out2 = jax.block_until_ready(qkv_attention(qkv2, n_heads2, kv_block=128))
    ref2 = qkv_attention_reference(qkv2, n_heads2)
    assert out2.shape == (N2, n_heads2 * C2, T2)
    assert jnp.allclose(out2, ref2, atol=2e-3, rtol=2e-3), "mismatch vs reference (test 2)"

    # Test 3: same data through the single-pass path (whole 256-wide KV row).
    out3 = jax.block_until_ready(qkv_attention(qkv2, n_heads2))
    assert jnp.allclose(out3, ref2, atol=2e-3, rtol=2e-3), "mismatch vs reference (test 3)"

    print("KERNEL_OK")
</pallas_src>

<mosaic_0001>
module attributes {stable_mosaic.version = 11 : i64} {
  func.func @_attn_single_pass_kernel(%arg0: i32, %arg1: i32, %arg2: memref<1x2x16x32xf32, #tpu.memory_space<vmem>>, %arg3: memref<1x2x16x32xf32, #tpu.memory_space<vmem>>, %arg4: memref<1x2x16x32xf32, #tpu.memory_space<vmem>>, %arg5: memref<1x2x16x32xf32, #tpu.memory_space<vmem>>) attributes {dimension_semantics = [#tpu.dimension_semantics<parallel>, #tpu.dimension_semantics<parallel>], iteration_bounds = array<i64: 2, 1>, scalar_prefetch = 0 : i64, scratch_operands = 0 : i64, tpu.core_type = #tpu.core_type<tc>, window_params = [{transform_indices = @transform_0, window_bounds = array<i64: 1, 2, 16, 32>}, {transform_indices = @transform_1, window_bounds = array<i64: 1, 2, 16, 32>}, {transform_indices = @transform_2, window_bounds = array<i64: 1, 2, 16, 32>}, {transform_indices = @transform_3, window_bounds = array<i64: 1, 2, 16, 32>}]} {
    %c0 = arith.constant 0 : index
    %c0_0 = arith.constant 0 : index
    %c0_1 = arith.constant 0 : index
    %c0_2 = arith.constant 0 : index
    %0 = vector.load %arg2[%c0, %c0_0, %c0_1, %c0_2] : memref<1x2x16x32xf32, #tpu.memory_space<vmem>>, vector<1x2x16x32xf32>
    %1 = vector.shape_cast %0 : vector<1x2x16x32xf32> to vector<2x16x32xf32>
    %c0_3 = arith.constant 0 : index
    %c0_4 = arith.constant 0 : index
    %c0_5 = arith.constant 0 : index
    %c0_6 = arith.constant 0 : index
    %2 = vector.load %arg3[%c0_3, %c0_4, %c0_5, %c0_6] : memref<1x2x16x32xf32, #tpu.memory_space<vmem>>, vector<1x2x16x32xf32>
    %3 = vector.shape_cast %2 : vector<1x2x16x32xf32> to vector<2x16x32xf32>
    %c0_7 = arith.constant 0 : index
    %c0_8 = arith.constant 0 : index
    %c0_9 = arith.constant 0 : index
    %c0_10 = arith.constant 0 : index
    %4 = vector.load %arg4[%c0_7, %c0_8, %c0_9, %c0_10] : memref<1x2x16x32xf32, #tpu.memory_space<vmem>>, vector<1x2x16x32xf32>
    %5 = vector.shape_cast %4 : vector<1x2x16x32xf32> to vector<2x16x32xf32>
    %cst = arith.constant dense<0.000000e+00> : vector<2x32x32xf32>
    %6 = tpu.matmul %3, %1, %cst {dimension_numbers = #tpu.dot_dimension_numbers<[1], [1], [2], [2], [0, 0, 0, 2, 1, 2], [0], [0]>} : vector<2x16x32xf32>, vector<2x16x32xf32>, vector<2x32x32xf32> -> vector<2x32x32xf32>
    %cst_11 = arith.constant 2.500000e-01 : f32
    %7 = vector.broadcast %cst_11 : f32 to vector<2x32x32xf32>
    %8 = arith.mulf %6, %7 : vector<2x32x32xf32>
    %cst_12 = arith.constant dense<0xFF800000> : vector<2x32xf32>
    %9 = vector.multi_reduction <maximumf>, %8, %cst_12 [1] : vector<2x32x32xf32> to vector<2x32xf32>
    %10 = vector.shape_cast %9 : vector<2x32xf32> to vector<2x1x32xf32>
    %11 = vector.broadcast %10 : vector<2x1x32xf32> to vector<2x32x32xf32>
    %12 = arith.subf %8, %11 : vector<2x32x32xf32>
    %13 = math.exp %12 : vector<2x32x32xf32>
    %cst_13 = arith.constant dense<0.000000e+00> : vector<2x32xf32>
    %14 = vector.multi_reduction <add>, %13, %cst_13 [1] : vector<2x32x32xf32> to vector<2x32xf32>
    %15 = vector.shape_cast %14 : vector<2x32xf32> to vector<2x1x32xf32>
    %16 = tpu.reciprocal %15 {approx = true} : vector<2x1x32xf32> -> vector<2x1x32xf32>
    %17 = vector.broadcast %16 : vector<2x1x32xf32> to vector<2x32x32xf32>
    %18 = arith.mulf %13, %17 : vector<2x32x32xf32>
    %cst_14 = arith.constant dense<0.000000e+00> : vector<2x16x32xf32>
    %19 = tpu.matmul %5, %18, %cst_14 {dimension_numbers = #tpu.dot_dimension_numbers<[2], [1], [1], [2], [0, 0, 0, 1, 1, 2], [0], [0]>} : vector<2x16x32xf32>, vector<2x32x32xf32>, vector<2x16x32xf32> -> vector<2x16x32xf32>
    %c0_15 = arith.constant 0 : index
    %c0_16 = arith.constant 0 : index
    %c0_17 = arith.constant 0 : index
    %c0_18 = arith.constant 0 : index
    %20 = vector.load %arg5[%c0_15, %c0_16, %c0_17, %c0_18] : memref<1x2x16x32xf32, #tpu.memory_space<vmem>>, vector<1x2x16x32xf32>
    %21 = vector.shape_cast %20 : vector<1x2x16x32xf32> to vector<2x16x32xf32>
    %22 = vector.shape_cast %19 : vector<2x16x32xf32> to vector<1x2x16x32xf32>
    tpu.vector_store %arg5[%c0_15, %c0_16, %c0_17, %c0_18], %22 {strides = array<i32>} : memref<1x2x16x32xf32, #tpu.memory_space<vmem>>, vector<1x2x16x32xf32>,
    return
  }
  func.func @transform_0(%arg0: i32, %arg1: i32) -> (i32, i32, i32, i32) {
    %c0_i32 = arith.constant 0 : i32
    %c0_i32_0 = arith.constant 0 : i32
    %c0_i32_1 = arith.constant 0 : i32
    return %arg0, %arg1, %c0_i32, %c0_i32_0 : i32, i32, i32, i32
  }
  func.func @transform_1(%arg0: i32, %arg1: i32) -> (i32, i32, i32, i32) {
    %c1_i32 = arith.constant 1 : i32
    %0 = arith.addi %c1_i32, %arg1 : i32
    %c0_i32 = arith.constant 0 : i32
    %c0_i32_0 = arith.constant 0 : i32
    %c0_i32_1 = arith.constant 0 : i32
    return %arg0, %0, %c0_i32, %c0_i32_0 : i32, i32, i32, i32
  }
  func.func @transform_2(%arg0: i32, %arg1: i32) -> (i32, i32, i32, i32) {
    %c2_i32 = arith.constant 2 : i32
    %0 = arith.addi %c2_i32, %arg1 : i32
    %c0_i32 = arith.constant 0 : i32
    %c0_i32_0 = arith.constant 0 : i32
    %c0_i32_1 = arith.constant 0 : i32
    return %arg0, %0, %c0_i32, %c0_i32_0 : i32, i32, i32, i32
  }
  func.func @transform_3(%arg0: i32, %arg1: i32) -> (i32, i32, i32, i32) {
    %c0_i32 = arith.constant 0 : i32
    %c0_i32_0 = arith.constant 0 : i32
    %c0_i32_1 = arith.constant 0 : i32
    return %arg0, %arg1, %c0_i32, %c0_i32_0 : i32, i32, i32, i32
  }
}

</mosaic_0001>

<llo_original>
// kernel: tpu_custom_call.1
$region0: #{tpu_custom_call.1}
  #allocation0 [shape = 'u32[]', space=smem, size = 0x4, offset = 0x4, fixed_abs, tag = 'smem constant byte address 0x4 - core index']
  #allocation1 [shape = 'u32[72,128]{1,0:T(1,128)}', space=vmem, size = 0x9000, scoped, tag = 'internal scratch']
  %s0 = inlined_call_operand.hbm [shape: f32[2,6,16,32], index: 0, kind: input, shape index: {}]
  %s1 = inlined_call_operand.hbm [shape: f32[2,6,16,32], index: 1, kind: input, shape index: {}]
  %s2 = inlined_call_operand.hbm [shape: f32[2,6,16,32], index: 2, kind: input, shape index: {}]
  %s3 = inlined_call_operand.hbm [shape: f32[2,2,16,32], index: 3, kind: output, shape index: {}]
  %s4 = sld [smem:[#allocation0]]
  $region57: #{tpu_custom_call.1} parent=0
    _
  %s6 = ssub.s32 1, %s4
  %s7 = scalar_select 0, %s6, %s4
  $region1: #{tpu_custom_call.1} parent=0
    #allocation2 [shape = 'u8[32768]{0}', space=vmem, size = 0x8000, scoped, tag = 'input window, operand 0']
    #allocation3 [shape = 's32[2]{0}', space=sflag, size = 0x8, scoped, tag = 'scoped memory for tpu_custom_call.1']
    #allocation4 [shape = 's32[2]{0}', space=sflag, size = 0x8, scoped, tag = 'scoped memory for tpu_custom_call.1']
    #allocation5 [shape = 'u8[32768]{0}', space=vmem, size = 0x8000, scoped, tag = 'input window, operand 1']
    #allocation6 [shape = 's32[2]{0}', space=sflag, size = 0x8, scoped, tag = 'scoped memory for tpu_custom_call.1']
    #allocation7 [shape = 'u8[32768]{0}', space=vmem, size = 0x8000, scoped, tag = 'input window, operand 2']
    #allocation8 [shape = 'u8[32768]{0}', space=vmem, size = 0x8000, scoped, tag = 'output window, operand 0']
    %8 = vsyncpa [#allocation3], 0
    %s9 = scalar_lea.sflag [#allocation3], 1
    %10 = vsyncpa %s9, 0
    %11 = vsyncpa [#allocation6], 0
    %s12 = scalar_lea.sflag [#allocation6], 1
    %13 = vsyncpa %s12, 0
    %14 = vsyncpa [#allocation4], 0
    %s15 = scalar_lea.sflag [#allocation4], 1
    %16 = vsyncpa %s15, 0
    loop: start=0, step=1, limit=4
    $region2: #{tpu_custom_call.1} parent=1 // loop_pre_header
      _
    $region3: #{tpu_custom_call.1} parent=1 // loop_header
      %s18 = sphi 0, %s22
      %p19 = scmp.ge.s32.totalorder %s18, 4
      %s25 = sphi 0, %s37
      %s26 = sphi 0, %s33
      %s27 = sphi 0, %s25
      %s28 = sphi 0, %s26
      %s29 = sphi 0, %s27
      %s30 = sphi 0, %s28
      %s42 = sphi 0, %s44
      %s45 = sphi 0, %s42
      %s46 = sphi 0, %s45
      %s62 = sphi 0, %s46
      %s72 = sphi 0, %s74
      %s75 = sphi 0, %s72
      %s76 = sphi 0, %s75
      %s92 = sphi 0, %s76
      %s102 = sphi 0, %s104
      %s105 = sphi 0, %s102
      %s106 = sphi 0, %s105
      %s122 = sphi 0, %s106
      %s130 = sphi 0, %s132
      %s133 = sphi 0, %s130
      %s134 = sphi 0, %s133
      %s150 = sphi 0, %s134
    $region4: #{tpu_custom_call.1} parent=1 // loop_header_branch
      %21 = sbr.rel (%p19) target = $region8
    $region5: #{tpu_custom_call.1} parent=1 // loop_body
      %s23 = ssub.s32 %s18, 1
      %s24 = ssub.s32 %s18, 2
      %s31 = sadd.s32 1, %s26
      %p32 = scmp.ge.s32.totalorder %s31, 1
      %s33 = scalar_select %p32, 0, %s31
      %s34 = sadd.s32 1, %s25
      %s35 = scalar_select %p32, %s34, %s25
      %p36 = scmp.ge.s32.totalorder %s35, 2
      %s37 = scalar_select %p36, 0, %s35
      %s38 = ssub.s32 %s25, %s37
      %s39 = ssub.s32 %s26, %s33
      %s40 = sor.u32 %s38, %s39
      %p41 = scmp.eq.s32.totalorder %s40, 0
      %s43 = sadd.s32 %s42, 1
      %s44 = scalar_select %p41, %s42, %s43
      %p47 = pneg %p41
      %p48 = scmp.eq.s32.totalorder %s18, 1
      %p49 = por %p47, %p48
      %p50 = scmp.ne.s32.totalorder %s42, %s45
      %p51 = scmp.eq.s32.totalorder %s18, 0
      %p52 = por %p50, %p51
      %p53 = scmp.ne.s32.totalorder %s42, %s45
      %p54 = scmp.eq.s32.totalorder %s23, 1
      %p55 = por %p53, %p54
      %p56 = scmp.ne.s32.totalorder %s45, %s46
      %p57 = scmp.eq.s32.totalorder %s23, 0
      %p58 = por %p56, %p57
      %p59 = scmp.ne.s32.totalorder %s45, %s46
      %p60 = scmp.eq.s32.totalorder %s24, 1
      %p61 = por %p59, %p60
      %p63 = scmp.ne.s32.totalorder %s46, %s62
      %p64 = scmp.eq.s32.totalorder %s24, 0
      %p65 = por %p63, %p64
      %s66 = sadd.s32 %s26, 1
      %s67 = sadd.s32 %s33, 1
      %s68 = ssub.s32 %s25, %s37
      %s69 = ssub.s32 %s66, %s67
      %s70 = sor.u32 %s68, %s69
      %p71 = scmp.eq.s32.totalorder %s70, 0
      %s73 = sadd.s32 %s72, 1
      %s74 = scalar_select %p71, %s72, %s73
      %p77 = pneg %p71
      %p78 = scmp.eq.s32.totalorder %s18, 1
      %p79 = por %p77, %p78
      %p80 = scmp.ne.s32.totalorder %s72, %s75
      %p81 = scmp.eq.s32.totalorder %s18, 0
      %p82 = por %p80, %p81
      %p83 = scmp.ne.s32.totalorder %s72, %s75
      %p84 = scmp.eq.s32.totalorder %s23, 1
      %p85 = por %p83, %p84
      %p86 = scmp.ne.s32.totalorder %s75, %s76
      %p87 = scmp.eq.s32.totalorder %s23, 0
      %p88 = por %p86, %p87
      %p89 = scmp.ne.s32.totalorder %s75, %s76
      %p90 = scmp.eq.s32.totalorder %s24, 1
      %p91 = por %p89, %p90
      %p93 = scmp.ne.s32.totalorder %s76, %s92
      %p94 = scmp.eq.s32.totalorder %s24, 0
      %p95 = por %p93, %p94
      %s96 = sadd.s32 %s26, 2
      %s97 = sadd.s32 %s33, 2
      %s98 = ssub.s32 %s25, %s37
      %s99 = ssub.s32 %s96, %s97
      %s100 = sor.u32 %s98, %s99
      %p101 = scmp.eq.s32.totalorder %s100, 0
      %s103 = sadd.s32 %s102, 1
      %s104 = scalar_select %p101, %s102, %s103
      %p107 = pneg %p101
      %p108 = scmp.eq.s32.totalorder %s18, 1
      %p109 = por %p107, %p108
      %p110 = scmp.ne.s32.totalorder %s102, %s105
      %p111 = scmp.eq.s32.totalorder %s18, 0
      %p112 = por %p110, %p111
      %p113 = scmp.ne.s32.totalorder %s102, %s105
      %p114 = scmp.eq.s32.totalorder %s23, 1
      %p115 = por %p113, %p114
      %p116 = scmp.ne.s32.totalorder %s105, %s106
      %p117 = scmp.eq.s32.totalorder %s23, 0
      %p118 = por %p116, %p117
      %p119 = scmp.ne.s32.totalorder %s105, %s106
      %p120 = scmp.eq.s32.totalorder %s24, 1
      %p121 = por %p119, %p120
      %p123 = scmp.ne.s32.totalorder %s106, %s122
      %p124 = scmp.eq.s32.totalorder %s24, 0
      %p125 = por %p123, %p124
      %s126 = ssub.s32 %s25, %s37
      %s127 = ssub.s32 %s26, %s33
      %s128 = sor.u32 %s126, %s127
      %p129 = scmp.eq.s32.totalorder %s128, 0
      %s131 = sadd.s32 %s130, 1
      %s132 = scalar_select %p129, %s130, %s131
      %p135 = pneg %p129
      %p136 = scmp.eq.s32.totalorder %s18, 1
      %p137 = por %p135, %p136
      %p138 = scmp.ne.s32.totalorder %s130, %s133
      %p139 = scmp.eq.s32.totalorder %s18, 0
      %p140 = por %p138, %p139
      %p141 = scmp.ne.s32.totalorder %s130, %s133
      %p142 = scmp.eq.s32.totalorder %s23, 1
      %p143 = por %p141, %p142
      %p144 = scmp.ne.s32.totalorder %s133, %s134
      %p145 = scmp.eq.s32.totalorder %s23, 0
      %p146 = por %p144, %p145
      %p147 = scmp.ne.s32.totalorder %s133, %s134
      %p148 = scmp.eq.s32.totalorder %s24, 1
      %p149 = por %p147, %p148
      %p151 = scmp.ne.s32.totalorder %s134, %s150
      %p152 = scmp.eq.s32.totalorder %s24, 0
      %p153 = por %p151, %p152
      %p154 = scmp.le.s32.totalorder 1, %s18
      %p155 = scmp.lt.s32.totalorder %s18, 3
      %p156 = pnand %p154, %p155
      %p157 = pneg %p156
      // Predicated region
      $region9: #{tpu_custom_call.1} parent=5 // pred_check
        _
      $region10: #{tpu_custom_call.1} parent=5 // pred_check_branch
        %159 = sbr.rel (%p156) target = $region12
      $region11: #{tpu_custom_call.1} parent=5 // pred_region
        %s160 = ssub.s32 %s18, 1
      $region12: #{tpu_custom_call.1} parent=5 // pred_fallthru
        _
      %p161 = scmp.lt.s32.totalorder %s18, 2
      // Predicated region
      $region13: #{tpu_custom_call.1} parent=5 // pred_check
        %p162 = pneg %p161
      $region14: #{tpu_custom_call.1} parent=5 // pred_check_branch
        %164 = sbr.rel (%p162) target = $region16
      $region15: #{tpu_custom_call.1} parent=5 // pred_region
        // Predicated region
        $region17: #{tpu_custom_call.1} parent=15 // pred_check
          %p165 = pneg %p52
        $region18: #{tpu_custom_call.1} parent=15 // pred_check_branch
          %167 = sbr.rel (%p165) target = $region20
        $region19: #{tpu_custom_call.1} parent=15 // pred_region
          %s168 = sand.u32 %s42, 1
          %s169 = scalar_lea.sflag [#allocation3], %s168
          %s170 = sand.u32 %s42, 1
          %s171 = smul.addr %s170, 32
          %s172 = scalar_lea.vmem [#allocation2], %s171
          %s173 = smul.u32 2, %s26
          %175 = vsyncadd %s169, 0
          %s176 = smul.addr %s173, 2
          %s177 = smul.addr %s25, 12
          %s178 = sadd.s32 %s176, %s177
          %s179 = smul.addr %s178, 8
          %s180 = scalar_lea.hbm %s0, %s179
          %s181 = sshll.u32 %s180, 4
          %s182 = int_to_ptr.hbm [resolvable:$true] %s181
          %s183 = sshll.u32 %s172, 4
          %s184 = int_to_ptr.vmem [resolvable:$true] %s183
          %189 = dma.hbm_to_vmem [thread:$0]  %s182, 512, %s184, %s169, 128, 128, 8
        $region20: #{tpu_custom_call.1} parent=15 // pred_fallthru
          _
        // Predicated region
        $region21: #{tpu_custom_call.1} parent=15 // pred_check
          %p190 = pneg %p82
        $region22: #{tpu_custom_call.1} parent=15 // pred_check_branch
          %192 = sbr.rel (%p190) target = $region24
        $region23: #{tpu_custom_call.1} parent=15 // pred_region
          %s193 = sand.u32 %s18, 1
          %s194 = scalar_lea.sflag [#allocation6], %s193
          %s195 = sand.u32 %s72, 1
          %s196 = smul.addr %s195, 32
          %s197 = scalar_lea.vmem [#allocation5], %s196
          %s198 = sadd.s32 %s26, 1
          %s199 = smul.u32 2, %s198
          %201 = vsyncadd %s194, 0
          %s202 = smul.addr %s199, 2
          %s203 = smul.addr %s25, 12
          %s204 = sadd.s32 %s202, %s203
          %s205 = smul.addr %s204, 8
          %s206 = scalar_lea.hbm %s1, %s205
          %s207 = sshll.u32 %s206, 4
          %s208 = int_to_ptr.hbm [resolvable:$true] %s207
          %s209 = sshll.u32 %s197, 4
          %s210 = int_to_ptr.vmem [resolvable:$true] %s209
          %215 = dma.hbm_to_vmem [thread:$0]  %s208, 512, %s210, %s194, 128, 128, 8
        $region24: #{tpu_custom_call.1} parent=15 // pred_fallthru
          _
        // Predicated region
        $region25: #{tpu_custom_call.1} parent=15 // pred_check
          %p216 = pneg %p112
        $region26: #{tpu_custom_call.1} parent=15 // pred_check_branch
          %218 = sbr.rel (%p216) target = $region28
        $region27: #{tpu_custom_call.1} parent=15 // pred_region
          %s219 = sand.u32 %s18, 1
          %s220 = scalar_lea.sflag [#allocation6], %s219
          %s221 = sand.u32 %s102, 1
          %s222 = smul.addr %s221, 32
          %s223 = scalar_lea.vmem [#allocation7], %s222
          %s224 = sadd.s32 %s26, 2
          %s225 = smul.u32 2, %s224
          %227 = vsyncadd %s220, 0
          %s228 = smul.addr %s225, 2
          %s229 = smul.addr %s25, 12
          %s230 = sadd.s32 %s228, %s229
          %s231 = smul.addr %s230, 8
          %s232 = scalar_lea.hbm %s2, %s231
          %s233 = sshll.u32 %s232, 4
          %s234 = int_to_ptr.hbm [resolvable:$true] %s233
          %s235 = sshll.u32 %s223, 4
          %s236 = int_to_ptr.vmem [resolvable:$true] %s235
          %241 = dma.hbm_to_vmem [thread:$0]  %s234, 512, %s236, %s220, 128, 128, 8
        $region28: #{tpu_custom_call.1} parent=15 // pred_fallthru
          _
      $region16: #{tpu_custom_call.1} parent=5 // pred_fallthru
        _
      %p242 = scmp.le.s32.totalorder 1, %s18
      %p243 = scmp.lt.s32.totalorder %s18, 3
      %p244 = pnand %p242, %p243
      %p245 = pneg %p244
      // Predicated region
      $region29: #{tpu_custom_call.1} parent=5 // pred_check
        _
      $region30: #{tpu_custom_call.1} parent=5 // pred_check_branch
        %247 = sbr.rel (%p244) target = $region32
      $region31: #{tpu_custom_call.1} parent=5 // pred_region
        %s248 = ssub.s32 %s18, 1
        %s249 = sand.u32 %s45, 1
        %s250 = scalar_lea.sflag [#allocation3], %s249
        %s251 = sand.u32 %s45, 1
        %s252 = smul.addr %s251, 32
        %s253 = scalar_lea.vmem [#allocation2], %s252
        // Predicated region
        $region33: #{tpu_custom_call.1} parent=31 // pred_check
          %p254 = pneg %p58
        $region34: #{tpu_custom_call.1} parent=31 // pred_check_branch
          %256 = sbr.rel (%p254) target = $region36
        $region35: #{tpu_custom_call.1} parent=31 // pred_region
          %258 = dma.done %s250, 512
        $region36: #{tpu_custom_call.1} parent=31 // pred_fallthru
          _
        %s259 = sand.u32 %s23, 1
        %s260 = scalar_lea.sflag [#allocation6], %s259
        %s261 = sand.u32 %s75, 1
        %s262 = smul.addr %s261, 32
        %s263 = scalar_lea.vmem [#allocation5], %s262
        // Predicated region
        $region37: #{tpu_custom_call.1} parent=31 // pred_check
          %p264 = pneg %p88
        $region38: #{tpu_custom_call.1} parent=31 // pred_check_branch
          %266 = sbr.rel (%p264) target = $region40
        $region39: #{tpu_custom_call.1} parent=31 // pred_region
          %268 = dma.done %s260, 512
        $region40: #{tpu_custom_call.1} parent=31 // pred_fallthru
          _
        %s269 = sand.u32 %s23, 1
        %s270 = scalar_lea.sflag [#allocation6], %s269
        %s271 = sand.u32 %s105, 1
        %s272 = smul.addr %s271, 32
        %s273 = scalar_lea.vmem [#allocation7], %s272
        // Predicated region
        $region41: #{tpu_custom_call.1} parent=31 // pred_check
          %p274 = pneg %p118
        $region42: #{tpu_custom_call.1} parent=31 // pred_check_branch
          %276 = sbr.rel (%p274) target = $region44
        $region43: #{tpu_custom_call.1} parent=31 // pred_region
          %278 = dma.done %s270, 512
        $region44: #{tpu_custom_call.1} parent=31 // pred_fallthru
          _
        %s279 = sand.u32 %s45, 1
        %s280 = scalar_lea.sflag [#allocation3], %s279
        %s281 = sand.u32 %s45, 1
        %s282 = smul.addr %s281, 32
        %s283 = scalar_lea.vmem [#allocation2], %s282
        %p284 = pneg %p58
        %p285 = pneg %p55
        %s286 = sand.u32 %s23, 1
        %s287 = scalar_lea.sflag [#allocation6], %s286
        %s288 = sand.u32 %s75, 1
        %s289 = smul.addr %s288, 32
        %s290 = scalar_lea.vmem [#allocation5], %s289
        %p291 = pneg %p88
        %p292 = pneg %p85
        %s293 = sand.u32 %s23, 1
        %s294 = scalar_lea.sflag [#allocation6], %s293
        %s295 = sand.u32 %s105, 1
        %s296 = smul.addr %s295, 32
        %s297 = scalar_lea.vmem [#allocation7], %s296
        %p298 = pneg %p118
        %p299 = pneg %p115
        %p300 = pneg %p146
        %p301 = pneg %p143
        %s302 = sand.u32 %s133, 1
        %s303 = scalar_lea.sflag [#allocation4], %s302
        %s304 = sand.u32 %s133, 1
        %s305 = smul.addr %s304, 32
        %s306 = scalar_lea.vmem [#allocation8], %s305
        %s307 = smul.u32 2, %s28
        %s308 = sadd.s32 %s28, 1
        %s309 = smul.u32 2, %s308
        %s310 = sadd.s32 %s28, 2
        %s311 = smul.u32 2, %s310
        %s312 = smul.u32 2, %s28
        %v313 = vld [vmem:[%s253] sm:$0xff]
        %v314 = vld [vmem:[%s253 + $0x8] sm:$0xff]
        %v315 = vld [vmem:[%s253 + $0x10] sm:$0xff]
        %v316 = vld [vmem:[%s253 + $0x18] sm:$0xff]
        %v317 = vld [vmem:[%s263] sm:$0xff]
        %v318 = vld [vmem:[%s263 + $0x8] sm:$0xff]
        %v319 = vld [vmem:[%s263 + $0x10] sm:$0xff]
        %v320 = vld [vmem:[%s263 + $0x18] sm:$0xff]
        %v321 = vld [vmem:[%s273] sm:$0xff]
        %v322 = vld [vmem:[%s273 + $0x8] sm:$0xff]
        %v323 = vld [vmem:[%s273 + $0x10] sm:$0xff]
        %v324 = vld [vmem:[%s273 + $0x18] sm:$0xff]
        %325 = vxpose.xlu0.b32.start [1/16] %v317, 128
        %326 = vxpose.xlu0.b32.cont [2/16] %v318, 128
        %327 = vxpose.xlu0.b32.cont [3/16] 0.0, 128
        %328 = vxpose.xlu0.b32.cont [4/16] 0.0, 128
        %329 = vxpose.xlu0.b32.cont [5/16] 0.0, 128
        %330 = vxpose.xlu0.b32.cont [6/16] 0.0, 128
        %331 = vxpose.xlu0.b32.cont [7/16] 0.0, 128
        %332 = vxpose.xlu0.b32.cont [8/16] 0.0, 128
        %333 = vxpose.xlu0.b32.cont [9/16] 0.0, 128
        %334 = vxpose.xlu0.b32.cont [10/16] 0.0, 128
        %335 = vxpose.xlu0.b32.cont [11/16] 0.0, 128
        %336 = vxpose.xlu0.b32.cont [12/16] 0.0, 128
        %337 = vxpose.xlu0.b32.cont [13/16] 0.0, 128
        %338 = vxpose.xlu0.b32.cont [14/16] 0.0, 128
        %339 = vxpose.xlu0.b32.cont [15/16] 0.0, 128
        %340 = vxpose.xlu0.b32.end [16/16] 0.0, 128
        %v341 = vpop.trf.xlu0
        %v342 = vpop.trf.xlu0
        %v343 = vpop.trf.xlu0
        %v344 = vpop.trf.xlu0
        %v345 = vpop.trf.xlu0
        %v346 = vpop.trf.xlu0
        %v347 = vpop.trf.xlu0
        %v348 = vpop.trf.xlu0
        %v349 = vpop.trf.xlu0
        %v350 = vpop.trf.xlu0
        %v351 = vpop.trf.xlu0
        %v352 = vpop.trf.xlu0
        %v353 = vpop.trf.xlu0
        %v354 = vpop.trf.xlu0
        %v355 = vpop.trf.xlu0
        %v356 = vpop.trf.xlu0
        %vm357 = vcmask 130048
        %v359 = vsel %vm357, %v341, 0
        %v362 = vsel %vm357, %v342, 0
        %v365 = vsel %vm357, %v343, 0
        %v368 = vsel %vm357, %v344, 0
        %370 = vmatpush.msra.mxu0 0.0
        %371 = vmatpush.msra.mxu0 0.0
        %372 = vmatpush.msra.mxu0 0.0
        %373 = vmatpush.msra.mxu0 0.0
        %374 = vmatpush.msra.mxu0 0.0
        %375 = vmatpush.msra.mxu0 0.0
        %376 = vmatpush.msra.mxu0 0.0
        %377 = vmatpush.msra.mxu0 0.0
        %378 = vmatpush.msra.mxu0 0.0
        %379 = vmatpush.msra.mxu0 0.0
        %380 = vmatpush.msra.mxu0 0.0
        %381 = vmatpush.msra.mxu0 0.0
        %382 = vmatpush.msra.mxu0 0.0
        %383 = vmatpush.msra.mxu0 0.0
        %384 = vmatpush.msra.mxu0 %v314
        %385 = vmatpush.msra.mxu0 %v313
        %386 = vmatmul.f32.gmra.mxu0 %v359
        %v387 = vpop.f32.mrf.mxu0
        %v388 = vadd.f32 0.0, %v387
        %389 = vmatmul.f32.gmra.mxu0 %v362
        %v390 = vpop.f32.mrf.mxu0
        %v391 = vadd.f32 0.0, %v390
        %392 = vmatmul.f32.gmra.mxu0 %v365
        %v393 = vpop.f32.mrf.mxu0
        %v394 = vadd.f32 0.0, %v393
        %395 = vmatmul.f32.gmra.mxu0 %v368
        %v396 = vpop.f32.mrf.mxu0
        %v397 = vadd.f32 0.0, %v396
        %398 = vdwg.mxu0
        %399 = vxpose.xlu0.b32.start [1/16] %v319, 128
        %400 = vxpose.xlu0.b32.cont [2/16] %v320, 128
        %401 = vxpose.xlu0.b32.cont [3/16] 0.0, 128
        %402 = vxpose.xlu0.b32.cont [4/16] 0.0, 128
        %403 = vxpose.xlu0.b32.cont [5/16] 0.0, 128
        %404 = vxpose.xlu0.b32.cont [6/16] 0.0, 128
        %405 = vxpose.xlu0.b32.cont [7/16] 0.0, 128
        %406 = vxpose.xlu0.b32.cont [8/16] 0.0, 128
        %407 = vxpose.xlu0.b32.cont [9/16] 0.0, 128
        %408 = vxpose.xlu0.b32.cont [10/16] 0.0, 128
        %409 = vxpose.xlu0.b32.cont [11/16] 0.0, 128
        %410 = vxpose.xlu0.b32.cont [12/16] 0.0, 128
        %411 = vxpose.xlu0.b32.cont [13/16] 0.0, 128
        %412 = vxpose.xlu0.b32.cont [14/16] 0.0, 128
        %413 = vxpose.xlu0.b32.cont [15/16] 0.0, 128
        %414 = vxpose.xlu0.b32.end [16/16] 0.0, 128
        %v415 = vpop.trf.xlu0
        %v416 = vpop.trf.xlu0
        %v417 = vpop.trf.xlu0
        %v418 = vpop.trf.xlu0
        %v419 = vpop.trf.xlu0
        %v420 = vpop.trf.xlu0
        %v421 = vpop.trf.xlu0
        %v422 = vpop.trf.xlu0
        %v423 = vpop.trf.xlu0
        %v424 = vpop.trf.xlu0
        %v425 = vpop.trf.xlu0
        %v426 = vpop.trf.xlu0
        %v427 = vpop.trf.xlu0
        %v428 = vpop.trf.xlu0
        %v429 = vpop.trf.xlu0
        %v430 = vpop.trf.xlu0
        %v432 = vsel %vm357, %v415, 0
        %v435 = vsel %vm357, %v416, 0
        %v438 = vsel %vm357, %v417, 0
        %v441 = vsel %vm357, %v418, 0
        %443 = vmatpush.msra.mxu0 0.0
        %444 = vmatpush.msra.mxu0 0.0
        %445 = vmatpush.msra.mxu0 0.0
        %446 = vmatpush.msra.mxu0 0.0
        %447 = vmatpush.msra.mxu0 0.0
        %448 = vmatpush.msra.mxu0 0.0
        %449 = vmatpush.msra.mxu0 0.0
        %450 = vmatpush.msra.mxu0 0.0
        %451 = vmatpush.msra.mxu0 0.0
        %452 = vmatpush.msra.mxu0 0.0
        %453 = vmatpush.msra.mxu0 0.0
        %454 = vmatpush.msra.mxu0 0.0
        %455 = vmatpush.msra.mxu0 0.0
        %456 = vmatpush.msra.mxu0 0.0
        %457 = vmatpush.msra.mxu0 %v316
        %458 = vmatpush.msra.mxu0 %v315
        %459 = vmatmul.f32.gmra.mxu0 %v432
        %v460 = vpop.f32.mrf.mxu0
        %v461 = vadd.f32 0.0, %v460
        %462 = vmatmul.f32.gmra.mxu0 %v435
        %v463 = vpop.f32.mrf.mxu0
        %v464 = vadd.f32 0.0, %v463
        %465 = vmatmul.f32.gmra.mxu0 %v438
        %v466 = vpop.f32.mrf.mxu0
        %v467 = vadd.f32 0.0, %v466
        %468 = vmatmul.f32.gmra.mxu0 %v441
        %v469 = vpop.f32.mrf.mxu0
        %v470 = vadd.f32 0.0, %v469
        %471 = vdwg.mxu0
        %v472 = vmul.f32 %v388, 0.25
        %v473 = vmul.f32 %v391, 0.25
        %v474 = vmul.f32 %v394, 0.25
        %v475 = vmul.f32 %v397, 0.25
        %v476 = vmul.f32 %v461, 0.25
        %v477 = vmul.f32 %v464, 0.25
        %v478 = vmul.f32 %v467, 0.25
        %v479 = vmul.f32 %v470, 0.25
        %vm480 = vcmask 261120
        %v481 = vsel %vm480, %v472, -inf
        %v482 = vsel %vm480, %v473, -inf
        %v483 = vsel %vm480, %v474, -inf
        %v484 = vmax.f32 %v481, %v483
        %v485 = vsel %vm480, %v475, -inf
        %v486 = vmax.f32 %v482, %v485
        %v487 = vmax.f32 %v484, %v486
        %v488 = vrot.slane %v487, 4
        %v489 = vmax.f32 %v487, %v488
        %v490 = vrot.slane %v489, 2
        %v491 = vmax.f32 %v489, %v490
        %v492 = vrot.slane %v491, 1
        %v493 = vmax.f32 %v491, %v492
        %v494 = vsel %vm480, %v476, -inf
        %v495 = vsel %vm480, %v477, -inf
        %v496 = vsel %vm480, %v478, -inf
        %v497 = vmax.f32 %v494, %v496
        %v498 = vsel %vm480, %v479, -inf
        %v499 = vmax.f32 %v495, %v498
        %v500 = vmax.f32 %v497, %v499
        %v501 = vrot.slane %v500, 4
        %v502 = vmax.f32 %v500, %v501
        %v503 = vrot.slane %v502, 2
        %v504 = vmax.f32 %v502, %v503
        %v505 = vrot.slane %v504, 1
        %v506 = vmax.f32 %v504, %v505
        %v507 = vsub.f32 %v472, %v493
        %v508 = vsub.f32 %v473, %v493
        %v509 = vsub.f32 %v474, %v493
        %v510 = vsub.f32 %v475, %v493
        %v511 = vsub.f32 %v476, %v506
        %v512 = vsub.f32 %v477, %v506
        %v513 = vsub.f32 %v478, %v506
        %v514 = vsub.f32 %v479, %v506
        %v515 = vmul.f32 %v507, 1.442695
        %v516 = vpow.pop %v515
        %v517 = vmul.f32 %v508, 1.442695
        %v518 = vpow.pop %v517
        %v519 = vmul.f32 %v509, 1.442695
        %v520 = vpow.pop %v519
        %v521 = vmul.f32 %v510, 1.442695
        %v522 = vpow.pop %v521
        %v523 = vmul.f32 %v511, 1.442695
        %v524 = vpow.pop %v523
        %v525 = vmul.f32 %v512, 1.442695
        %v526 = vpow.pop %v525
        %v527 = vmul.f32 %v513, 1.442695
        %v528 = vpow.pop %v527
        %v529 = vmul.f32 %v514, 1.442695
        %v530 = vpow.pop %v529
        %v531 = vsel %vm480, %v516, 0.0
        %v532 = vsel %vm480, %v518, 0.0
        %v533 = vadd.f32 %v531, %v532
        %v534 = vsel %vm480, %v520, 0.0
        %v535 = vadd.f32 %v533, %v534
        %v536 = vsel %vm480, %v522, 0.0
        %v537 = vadd.f32 %v535, %v536
        %v538 = vrot.slane %v537, 4
        %v539 = vadd.f32 %v537, %v538
        %v540 = vrot.slane %v539, 2
        %v541 = vadd.f32 %v539, %v540
        %v542 = vrot.slane %v541, 1
        %v543 = vadd.f32 %v541, %v542
        %v544 = vsel %vm480, %v524, 0.0
        %v545 = vsel %vm480, %v526, 0.0
        %v546 = vadd.f32 %v544, %v545
        %v547 = vsel %vm480, %v528, 0.0
        %v548 = vadd.f32 %v546, %v547
        %v549 = vsel %vm480, %v530, 0.0
        %v550 = vadd.f32 %v548, %v549
        %v551 = vrot.slane %v550, 4
        %v552 = vadd.f32 %v550, %v551
        %v553 = vrot.slane %v552, 2
        %v554 = vadd.f32 %v552, %v553
        %v555 = vrot.slane %v554, 1
        %v556 = vadd.f32 %v554, %v555
        %v557 = vrcp.pop %v543
        %v558 = vrcp.pop %v556
        %v559 = vmul.f32 %v516, %v557
        %v560 = vmul.f32 %v518, %v557
        %v561 = vmul.f32 %v520, %v557
        %v562 = vmul.f32 %v522, %v557
        %v563 = vmul.f32 %v524, %v558
        %v564 = vmul.f32 %v526, %v558
        %v565 = vmul.f32 %v528, %v558
        %v566 = vmul.f32 %v530, %v558
        %v568 = vsel %vm480, %v321, 0
        %v571 = vsel %vm480, %v322, 0
        %573 = vmatpush.msra.mxu0 0.0
        %574 = vmatpush.msra.mxu0 0.0
        %575 = vmatpush.msra.mxu0 0.0
        %576 = vmatpush.msra.mxu0 0.0
        %577 = vmatpush.msra.mxu0 0.0
        %578 = vmatpush.msra.mxu0 0.0
        %579 = vmatpush.msra.mxu0 0.0
        %580 = vmatpush.msra.mxu0 0.0
        %581 = vmatpush.msra.mxu0 0.0
        %582 = vmatpush.msra.mxu0 0.0
        %583 = vmatpush.msra.mxu0 0.0
        %584 = vmatpush.msra.mxu0 0.0
        %585 = vmatpush.msra.mxu0 %v562
        %586 = vmatpush.msra.mxu0 %v561
        %587 = vmatpush.msra.mxu0 %v560
        %588 = vmatpush.msra.mxu0 %v559
        %589 = vmatmul.f32.gmra.mxu0 %v568
        %v590 = vpop.f32.mrf.mxu0
        %v591 = vadd.f32 0.0, %v590
        %592 = vmatmul.f32.gmra.mxu0 %v571
        %v593 = vpop.f32.mrf.mxu0
        %v594 = vadd.f32 0.0, %v593
        %595 = vdwg.mxu0
        %v597 = vsel %vm480, %v323, 0
        %v600 = vsel %vm480, %v324, 0
        %602 = vmatpush.msra.mxu0 0.0
        %603 = vmatpush.msra.mxu0 0.0
        %604 = vmatpush.msra.mxu0 0.0
        %605 = vmatpush.msra.mxu0 0.0
        %606 = vmatpush.msra.mxu0 0.0
        %607 = vmatpush.msra.mxu0 0.0
        %608 = vmatpush.msra.mxu0 0.0
        %609 = vmatpush.msra.mxu0 0.0
        %610 = vmatpush.msra.mxu0 0.0
        %611 = vmatpush.msra.mxu0 0.0
        %612 = vmatpush.msra.mxu0 0.0
        %613 = vmatpush.msra.mxu0 0.0
        %614 = vmatpush.msra.mxu0 %v566
        %615 = vmatpush.msra.mxu0 %v565
        %616 = vmatpush.msra.mxu0 %v564
        %617 = vmatpush.msra.mxu0 %v563
        %618 = vmatmul.f32.gmra.mxu0 %v597
        %v619 = vpop.f32.mrf.mxu0
        %v620 = vadd.f32 0.0, %v619
        %621 = vmatmul.f32.gmra.mxu0 %v600
        %v622 = vpop.f32.mrf.mxu0
        %v623 = vadd.f32 0.0, %v622
        %624 = vdwg.mxu0
        %625 = vst.msk [vmem:[%s306] sm:$0xff] %vm480, %v591
        %626 = vst.msk [vmem:[%s306 + $0x8] sm:$0xff] %vm480, %v594
        %627 = vst.msk [vmem:[%s306 + $0x10] sm:$0xff] %vm480, %v620
        %628 = vst.msk [vmem:[%s306 + $0x18] sm:$0xff] %vm480, %v623
        %s629 = sand.u32 %s133, 1
        %s630 = scalar_lea.sflag [#allocation4], %s629
        %s631 = sand.u32 %s133, 1
        %s632 = smul.addr %s631, 32
        %s633 = scalar_lea.vmem [#allocation8], %s632
        // Predicated region
        $region45: #{tpu_custom_call.1} parent=31 // pred_check
          %p634 = pneg %p143
        $region46: #{tpu_custom_call.1} parent=31 // pred_check_branch
          %636 = sbr.rel (%p634) target = $region48
        $region47: #{tpu_custom_call.1} parent=31 // pred_region
          %s637 = smul.u32 2, %s28
          %639 = vsyncadd %s630, 0
          %s640 = smul.addr %s637, 2
          %s641 = smul.addr %s27, 4
          %s642 = sadd.s32 %s640, %s641
          %s643 = smul.addr %s642, 8
          %s644 = scalar_lea.hbm %s3, %s643
          %s645 = sshll.u32 %s633, 4
          %s646 = int_to_ptr.vmem [resolvable:$true] %s645
          %s647 = sshll.u32 %s644, 4
          %s648 = int_to_ptr.hbm [resolvable:$true] %s647
          %653 = dma.vmem_to_hbm [thread:$0]  %s646, 512, %s648, %s630, 128, 128, 8
        $region48: #{tpu_custom_call.1} parent=31 // pred_fallthru
          _
      $region32: #{tpu_custom_call.1} parent=5 // pred_fallthru
        _
      %p654 = scmp.le.s32.totalorder 2, %s18
      // Predicated region
      $region49: #{tpu_custom_call.1} parent=5 // pred_check
        %p655 = pneg %p654
      $region50: #{tpu_custom_call.1} parent=5 // pred_check_branch
        %657 = sbr.rel (%p655) target = $region52
      $region51: #{tpu_custom_call.1} parent=5 // pred_region
        %s658 = ssub.s32 %s18, 2
        // Predicated region
        $region53: #{tpu_custom_call.1} parent=51 // pred_check
          %p659 = pneg %p149
        $region54: #{tpu_custom_call.1} parent=51 // pred_check_branch
          %661 = sbr.rel (%p659) target = $region56
        $region55: #{tpu_custom_call.1} parent=51 // pred_region
          %s662 = sand.u32 %s134, 1
          %s663 = scalar_lea.sflag [#allocation4], %s662
          %s664 = sand.u32 %s134, 1
          %s665 = smul.addr %s664, 32
          %s666 = scalar_lea.vmem [#allocation8], %s665
          %668 = dma.done %s663, 512
        $region56: #{tpu_custom_call.1} parent=51 // pred_fallthru
          _
      $region52: #{tpu_custom_call.1} parent=5 // pred_fallthru
        _
    $region6: #{tpu_custom_call.1} parent=1 // loop_footer
      %s22 = sadd.s32 1, %s18
    $region7: #{tpu_custom_call.1} parent=1 // loop_footer_branch
      %17 = sbr.rel target = $region3
    $region8: #{tpu_custom_call.1} parent=1 // loop_exit
      _
    %669 = vsyncpa [#allocation3], 1
    %s670 = scalar_lea.sflag [#allocation3], 1
    %671 = vsyncpa %s670, 1
    %672 = vsyncpa [#allocation6], 1
    %s673 = scalar_lea.sflag [#allocation6], 1
    %674 = vsyncpa %s673, 1
    %675 = vsyncpa [#allocation4], 1
    %s676 = scalar_lea.sflag [#allocation4], 1
    %677 = vsyncpa %s676, 1

</llo_original>
